<compile_context>
chip_gen: v6e
topology: v6e:2x2x1
jax: 0.10.0
libtpu: 0.0.40
codegen_flags: <defaults>
</compile_context>

<pallas_src>
import functools

import jax
import jax.numpy as jnp
from jax import lax
from jax.experimental import pallas as pl
from jax.experimental.pallas import tpu as pltpu

IN_CH = 6                 # 3 RGB (frame t) + 3 RGB (frame t+1)
HIDDEN = 32
NUM_CLASSES = 8           # stand-in for len(dataloader.classes) (undefined in source)
NUM_HEAD_CH = NUM_CLASSES + 1 + 2 + 2       # sem + center + offset + nxtoffset = 13
NUM_COMB_CH = 2 * NUM_CLASSES + 5           # sem(8) + next-sem(8) + cen/off/nxt(5) = 21
ROW_CEN = 2 * NUM_CLASSES                   # row 16 in the combined head output
LABEL_DIVISOR = 1000

LANE = 128
MAX_TILE_HW = 16384       # pixels per grid step (~11 MB VMEM incl. intermediates)
MIN_TILE_HW = 2048        # below this the ~0.35us per-step overhead dominates
MIN_GRID_STEPS = 4        # enough steps to feed 2 TensorCores on v7x


# ----------------------------------------------------------------------------
# helpers
# ----------------------------------------------------------------------------
def _cdiv(a, b):
    return -(-a // b)


def _round_up(a, b):
    return _cdiv(a, b) * b


def _plan_tile(hw, n_batch):
    """Pixels per grid step: multiple of 128 (or == hw).  Big tiles by default,
    shrunk only to give a dual-TC chip a few steps, never below MIN_TILE_HW."""
    if hw % LANE != 0 and hw <= MAX_TILE_HW:
        return hw                                   # one full-extent block
    tile = min(_round_up(hw, LANE), MAX_TILE_HW)
    while n_batch * _cdiv(hw, tile) < MIN_GRID_STEPS and tile // 2 >= MIN_TILE_HW:
        tile = _round_up(tile // 2, LANE)
    return tile


# ----------------------------------------------------------------------------
# weight preparation (normalization folded in, dual pass fused, bf16 operands)
# ----------------------------------------------------------------------------
def prepare_train_weights(params):
    w1t, b1, wh, bh = params
    w1p = (w1t / 127.5).astype(jnp.bfloat16)                         # (32, 6)
    b1p = (b1 - jnp.sum(w1t, axis=1, keepdims=True)).astype(jnp.float32)
    return w1p, b1p, wh.astype(jnp.bfloat16), bh.astype(jnp.float32)


def prepare_infer_weights(params):
    w1t, b1, wh, bh = params
    w1n = w1t / 127.5
    w1s = jnp.concatenate([w1n[:, 3:], w1n[:, :3]], axis=1)          # swapped frames
    b1n = b1 - jnp.sum(w1t, axis=1, keepdims=True)
    w1c = jnp.concatenate([w1n, w1s], axis=0).astype(jnp.bfloat16)   # (64, 6)
    b1c = jnp.concatenate([b1n, b1n], axis=0).astype(jnp.float32)    # (64, 1)
    zs = jnp.zeros((NUM_CLASSES, HIDDEN), jnp.float32)
    zr = jnp.zeros((NUM_HEAD_CH - NUM_CLASSES, HIDDEN), jnp.float32)
    # combined head rows: [sem(8) | next-sem(8) | center, offset(2), nxtoffset(2)]
    whc = jnp.concatenate([
        jnp.concatenate([wh[:NUM_CLASSES], zs], axis=1),
        jnp.concatenate([zs, wh[:NUM_CLASSES]], axis=1),
        jnp.concatenate([wh[NUM_CLASSES:], zr], axis=1),
    ], axis=0).astype(jnp.bfloat16)                                  # (21, 64)
    bhc = jnp.concatenate([bh[:NUM_CLASSES], bh[:NUM_CLASSES], bh[NUM_CLASSES:]],
                          axis=0).astype(jnp.float32)                # (21, 1)
    return w1c, b1c, whc, bhc


# ----------------------------------------------------------------------------
# Pallas kernels
# ----------------------------------------------------------------------------
def _sublane_argmax(logits):
    """(C, T) f32 -> (1, T) int32 first-max index (matches torch.argmax)."""
    c = logits.shape[0]
    idx = lax.broadcasted_iota(jnp.int32, logits.shape, 0)
    maxv = jnp.max(logits, axis=0, keepdims=True)
    cand = jnp.where(logits == maxv, idx, c)
    return jnp.min(cand, axis=0, keepdims=True)


def _to_bf16(x):
    if x.dtype == jnp.bfloat16:
        return x
    return x.astype(jnp.float32).astype(jnp.bfloat16)


def _infer_kernel(x_ref, w1_ref, b1_ref, wh_ref, bh_ref,
                  sem_ref, pan_ref, npan_ref, cen_ref, off_ref, nxt_ref):
    # x: (6, T) raw pixels on lanes.  Normalization is folded into w1/b1.
    x = _to_bf16(x_ref[...])
    h = jnp.maximum(
        jnp.dot(w1_ref[...], x, preferred_element_type=jnp.float32) + b1_ref[...],
        0.0)                                                  # (64, T) f32
    y = jnp.dot(wh_ref[...], h.astype(jnp.bfloat16),
                preferred_element_type=jnp.float32) + bh_ref[...]   # (21, T) f32
    sem = _sublane_argmax(y[:NUM_CLASSES])                    # (1, T) int32
    nsem = _sublane_argmax(y[NUM_CLASSES:2 * NUM_CLASSES])    # (1, T) int32
    sem_ref[...] = sem
    pan_ref[...] = sem * LABEL_DIVISOR
    npan_ref[...] = nsem * LABEL_DIVISOR
    cen_ref[...] = y[ROW_CEN:ROW_CEN + 1]
    off_ref[...] = y[ROW_CEN + 1:ROW_CEN + 3]
    nxt_ref[...] = y[ROW_CEN + 3:ROW_CEN + 5]


def _train_kernel(x_ref, w1_ref, b1_ref, wh_ref, bh_ref,
                  sem_ref, cen_ref, off_ref, nxt_ref):
    # Training variant: raw semantic logits are returned (used by losses).
    x = _to_bf16(x_ref[...])
    h = jnp.maximum(
        jnp.dot(w1_ref[...], x, preferred_element_type=jnp.float32) + b1_ref[...],
        0.0)
    y = jnp.dot(wh_ref[...], h.astype(jnp.bfloat16),
                preferred_element_type=jnp.float32) + bh_ref[...]   # (13, T)
    sem_ref[...] = y[:NUM_CLASSES]
    cen_ref[...] = y[NUM_CLASSES:NUM_CLASSES + 1]
    off_ref[...] = y[NUM_CLASSES + 1:NUM_CLASSES + 3]
    nxt_ref[...] = y[NUM_CLASSES + 3:NUM_CLASSES + 5]


# ----------------------------------------------------------------------------
# pallas_call wrappers
# ----------------------------------------------------------------------------
def run_backbone_infer(x_nchw, prep):
    """Fused inference forward for BOTH frame orders; emits final tensors."""
    n, c, h, w = x_nchw.shape
    assert c == IN_CH
    hw = h * w
    tile = _plan_tile(hw, n)
    x_pix = x_nchw.reshape(n, c, hw)                 # free reshape (layout-compatible)
    w1c, b1c, whc, bhc = prep

    grid = (n, _cdiv(hw, tile))
    chan = lambda ch: pl.BlockSpec((None, ch, tile), lambda b, t: (b, 0, t))
    full = lambda a: pl.BlockSpec(a.shape, lambda b, t: (0, 0))

    sem, pan, npan, cen, off, nxt = pl.pallas_call(
        _infer_kernel,
        out_shape=[
            jax.ShapeDtypeStruct((n, 1, hw), jnp.int32),    # semantic ids
            jax.ShapeDtypeStruct((n, 1, hw), jnp.int32),    # panoptic (= sem*1000)
            jax.ShapeDtypeStruct((n, 1, hw), jnp.int32),    # next panoptic
            jax.ShapeDtypeStruct((n, 1, hw), jnp.float32),  # center
            jax.ShapeDtypeStruct((n, 2, hw), jnp.float32),  # offset
            jax.ShapeDtypeStruct((n, 2, hw), jnp.float32),  # nxtoffset
        ],
        grid=grid,
        in_specs=[chan(IN_CH), full(w1c), full(b1c), full(whc), full(bhc)],
        out_specs=[chan(1), chan(1), chan(1), chan(1), chan(2), chan(2)],
        compiler_params=pltpu.CompilerParams(
            dimension_semantics=("parallel", "parallel"),
            vmem_limit_bytes=32 * 1024 * 1024),
    )(x_pix, w1c, b1c, whc, bhc)

    return {
        "semantic": sem.reshape(n, h, w),
        "panoptic": pan.reshape(n, h, w),
        "next_panoptic": npan.reshape(n, h, w),
        "center": cen.reshape(n, h, w),
        "offset": off.reshape(n, 2, h, w),
        "nxtoffset": nxt.reshape(n, 2, h, w),
    }


def run_backbone_train(x_nchw, prep):
    """Single-pass forward returning raw logits (training path)."""
    n, c, h, w = x_nchw.shape
    assert c == IN_CH
    hw = h * w
    tile = _plan_tile(hw, n)
    x_pix = x_nchw.reshape(n, c, hw)
    w1p, b1p, whp, bhp = prep

    grid = (n, _cdiv(hw, tile))
    chan = lambda ch: pl.BlockSpec((None, ch, tile), lambda b, t: (b, 0, t))
    full = lambda a: pl.BlockSpec(a.shape, lambda b, t: (0, 0))

    sem, cen, off, nxt = pl.pallas_call(
        _train_kernel,
        out_shape=[
            jax.ShapeDtypeStruct((n, NUM_CLASSES, hw), jnp.float32),
            jax.ShapeDtypeStruct((n, 1, hw), jnp.float32),
            jax.ShapeDtypeStruct((n, 2, hw), jnp.float32),
            jax.ShapeDtypeStruct((n, 2, hw), jnp.float32),
        ],
        grid=grid,
        in_specs=[chan(IN_CH), full(w1p), full(b1p), full(whp), full(bhp)],
        out_specs=[chan(NUM_CLASSES), chan(1), chan(2), chan(2)],
        compiler_params=pltpu.CompilerParams(
            dimension_semantics=("parallel", "parallel"),
            vmem_limit_bytes=32 * 1024 * 1024),
    )(x_pix, w1p, b1p, whp, bhp)

    return {
        "semantic": sem.reshape(n, NUM_CLASSES, h, w),
        "center": cen.reshape(n, 1, h, w),
        "offset": off.reshape(n, 2, h, w),
        "nxtoffset": nxt.reshape(n, 2, h, w),
    }


# ----------------------------------------------------------------------------
# Post-processing / stitching (simplified — originals undefined in source)
# ----------------------------------------------------------------------------
def video_stitch(concat_next_panoptic, next_panoptic):
    # TODO(synk): VideoPanopticPredictionStitcher (temporal instance-id
    # re-labelling) is not defined in the provided source; identity passthrough.
    del concat_next_panoptic
    return next_panoptic


# ----------------------------------------------------------------------------
# PanopticModel.forward
# ----------------------------------------------------------------------------
@functools.partial(jax.jit, static_argnames=("training",))
def panoptic_forward(input_tensor, params, training=False):
    """input_tensor: (N, 6, H, W) raw pixels 0..255 (bf16/f32/int), NCHW."""
    if training:
        result = run_backbone_train(input_tensor, prepare_train_weights(params))
        # torch: result['center'] = torch.squeeze(result['center'], dim=1)
        result["center"] = jnp.squeeze(result["center"], axis=1)
        return result

    fused = run_backbone_infer(input_tensor, prepare_infer_weights(params))
    # TODO(synk): the real PostProcessor (center NMS + offset instance grouping)
    # is not defined in the provided source; instance ids are 0, so panoptic =
    # semantic * label_divisor and all of it is produced inside the kernel.
    sem = fused["semantic"]
    instance = jnp.zeros_like(sem)
    result = {
        "offset": fused["offset"],         # raw head, as in the torch result
        "nxtoffset": fused["nxtoffset"],   # raw head, as in the torch result
        "semantic": sem,
        "center": fused["center"],
        "instance": instance,
        "instance_scores": jnp.zeros(sem.shape, jnp.float32),
        "panoptic": fused["panoptic"],
    }
    next_panoptic = fused["next_panoptic"]           # swapped-pass panoptic
    result["concat_next_panoptic"] = next_panoptic
    result["next_panoptic"] = video_stitch(next_panoptic, next_panoptic)
    # torch: result['center'] = torch.squeeze(result['center'], dim=1)
    if result["center"].ndim > 1 and result["center"].shape[1] == 1:
        result["center"] = jnp.squeeze(result["center"], axis=1)
    return result


# ----------------------------------------------------------------------------
# Deterministic parameter init (synthetic backbone — MonoDVPS is undefined)
# ----------------------------------------------------------------------------
def init_params(key):
    k1, k2 = jax.random.split(key, 2)
    w1t = jax.random.normal(k1, (HIDDEN, IN_CH), jnp.float32) / jnp.sqrt(
        jnp.float32(IN_CH))
    b1 = jnp.zeros((HIDDEN, 1), jnp.float32)
    # packed heads: rows = [semantic(8), center(1), offset(2), nxtoffset(2)]
    wh = jax.random.normal(k2, (NUM_HEAD_CH, HIDDEN), jnp.float32) / jnp.sqrt(
        jnp.float32(HIDDEN))
    bh = jnp.zeros((NUM_HEAD_CH, 1), jnp.float32)
    return (w1t, b1, wh, bh)


# ----------------------------------------------------------------------------
# Pure-JAX references (replay the prepared/folded math in f32)
# ----------------------------------------------------------------------------
def _replay(x, w1, b1, wh, bh):
    n, c, h, w = x.shape
    xf = x.astype(jnp.float32).reshape(n, c, h * w)
    hid = jnp.maximum(
        jnp.einsum("oc,ncp->nop", w1.astype(jnp.float32), xf,
                   precision=lax.Precision.HIGHEST) + b1[None], 0.0)
    hid = hid.astype(jnp.bfloat16).astype(jnp.float32)
    y = jnp.einsum("oc,ncp->nop", wh.astype(jnp.float32), hid,
                   precision=lax.Precision.HIGHEST) + bh[None]
    return y.reshape(n, -1, h, w)


def _argmax_matches(ids, logits, tol=1e-2):
    ref_ids = jnp.argmax(logits, axis=1)
    srt = jnp.sort(logits, axis=1)
    gap = srt[:, -1] - srt[:, -2]
    return bool(jnp.all((ids == ref_ids) | (gap < tol)))


if __name__ == "__main__":
    key = jax.random.PRNGKey(0)
    pkey, xkey = jax.random.split(key)
    params = init_params(pkey)

    N, H, W = 2, 16, 16
    # Raw camera pixels: integers 0..255 are exact in bf16 (halves input reads
    # vs f32).  TODO(synk): feed uint8 directly if the data pipeline allows.
    x_int = jax.random.randint(xkey, (N, IN_CH, H, W), 0, 256, jnp.int32)
    x = x_int.astype(jnp.bfloat16)

    # ---- inference path ----
    out = panoptic_forward(x, params, training=False)
    jax.tree_util.tree_map(jax.block_until_ready, out)

    assert out["semantic"].shape == (N, H, W) and out["semantic"].dtype == jnp.int32
    assert out["panoptic"].shape == (N, H, W)
    assert out["center"].shape == (N, H, W)
    assert out["offset"].shape == (N, 2, H, W)
    assert out["nxtoffset"].shape == (N, 2, H, W)
    assert out["next_panoptic"].shape == (N, H, W)
    assert out["concat_next_panoptic"].shape == (N, H, W)

    w1c, b1c, whc, bhc = prepare_infer_weights(params)
    y_ref = _replay(x, w1c, b1c, whc, bhc)                    # (N, 21, H, W)
    sem_logits = y_ref[:, :NUM_CLASSES]
    nsem_logits = y_ref[:, NUM_CLASSES:2 * NUM_CLASSES]
    assert _argmax_matches(out["semantic"], sem_logits)
    assert _argmax_matches(out["concat_next_panoptic"] // LABEL_DIVISOR, nsem_logits)
    assert bool(jnp.all(out["panoptic"] == out["semantic"] * LABEL_DIVISOR))
    assert bool(jnp.all(out["next_panoptic"] == out["concat_next_panoptic"]))
    assert bool(jnp.allclose(out["center"], y_ref[:, ROW_CEN], atol=1e-2, rtol=1e-2))
    assert bool(jnp.allclose(out["offset"], y_ref[:, ROW_CEN + 1:ROW_CEN + 3],
                             atol=1e-2, rtol=1e-2))
    assert bool(jnp.allclose(out["nxtoffset"], y_ref[:, ROW_CEN + 3:ROW_CEN + 5],
                             atol=1e-2, rtol=1e-2))

    # ---- training path (raw-logits variant) ----
    tr = panoptic_forward(x, params, training=True)
    jax.tree_util.tree_map(jax.block_until_ready, tr)
    w1p, b1p, whp, bhp = prepare_train_weights(params)
    y_tr = _replay(x, w1p, b1p, whp, bhp)                     # (N, 13, H, W)
    assert tr["semantic"].shape == (N, NUM_CLASSES, H, W)
    assert tr["center"].shape == (N, H, W)
    assert bool(jnp.allclose(tr["semantic"], y_tr[:, :NUM_CLASSES],
                             atol=1e-2, rtol=1e-2))
    assert bool(jnp.allclose(tr["center"], y_tr[:, NUM_CLASSES], atol=1e-2, rtol=1e-2))
    assert bool(jnp.allclose(tr["offset"], y_tr[:, NUM_CLASSES + 1:NUM_CLASSES + 3],
                             atol=1e-2, rtol=1e-2))
    assert bool(jnp.allclose(tr["nxtoffset"], y_tr[:, NUM_CLASSES + 3:NUM_CLASSES + 5],
                             atol=1e-2, rtol=1e-2))

    print("KERNEL_OK")
</pallas_src>

<mosaic_0001>
module attributes {stable_mosaic.version = 11 : i64} {
  func.func @_infer_kernel(%arg0: i32, %arg1: i32, %arg2: memref<1x6x256xbf16, #tpu.memory_space<vmem>>, %arg3: memref<64x6xbf16, #tpu.memory_space<vmem>>, %arg4: memref<64x1xf32, #tpu.memory_space<vmem>>, %arg5: memref<21x64xbf16, #tpu.memory_space<vmem>>, %arg6: memref<21x1xf32, #tpu.memory_space<vmem>>, %arg7: memref<1x1x256xi32, #tpu.memory_space<vmem>>, %arg8: memref<1x1x256xi32, #tpu.memory_space<vmem>>, %arg9: memref<1x1x256xi32, #tpu.memory_space<vmem>>, %arg10: memref<1x1x256xf32, #tpu.memory_space<vmem>>, %arg11: memref<1x2x256xf32, #tpu.memory_space<vmem>>, %arg12: memref<1x2x256xf32, #tpu.memory_space<vmem>>) attributes {dimension_semantics = [#tpu.dimension_semantics<parallel>, #tpu.dimension_semantics<parallel>], iteration_bounds = array<i64: 2, 1>, scalar_prefetch = 0 : i64, scratch_operands = 0 : i64, tpu.core_type = #tpu.core_type<tc>, window_params = [{transform_indices = @transform_0, window_bounds = array<i64: 1, 6, 256>}, {pipeline_mode = #tpu.pipeline_mode<synchronous>, transform_indices = @transform_1, window_bounds = array<i64: 64, 6>}, {pipeline_mode = #tpu.pipeline_mode<synchronous>, transform_indices = @transform_2, window_bounds = array<i64: 64, 1>}, {pipeline_mode = #tpu.pipeline_mode<synchronous>, transform_indices = @transform_3, window_bounds = array<i64: 21, 64>}, {pipeline_mode = #tpu.pipeline_mode<synchronous>, transform_indices = @transform_4, window_bounds = array<i64: 21, 1>}, {transform_indices = @transform_5, window_bounds = array<i64: 1, 1, 256>}, {transform_indices = @transform_6, window_bounds = array<i64: 1, 1, 256>}, {transform_indices = @transform_7, window_bounds = array<i64: 1, 1, 256>}, {transform_indices = @transform_8, window_bounds = array<i64: 1, 1, 256>}, {transform_indices = @transform_9, window_bounds = array<i64: 1, 2, 256>}, {transform_indices = @transform_10, window_bounds = array<i64: 1, 2, 256>}]} {
    %c0 = arith.constant 0 : index
    %c0_0 = arith.constant 0 : index
    %c0_1 = arith.constant 0 : index
    %0 = vector.load %arg2[%c0, %c0_0, %c0_1] : memref<1x6x256xbf16, #tpu.memory_space<vmem>>, vector<1x6x256xbf16>
    %1 = vector.shape_cast %0 : vector<1x6x256xbf16> to vector<6x256xbf16>
    %c0_2 = arith.constant 0 : index
    %c0_3 = arith.constant 0 : index
    %2 = vector.load %arg3[%c0_2, %c0_3] : memref<64x6xbf16, #tpu.memory_space<vmem>>, vector<64x6xbf16>
    %cst = arith.constant dense<0.000000e+00> : vector<64x256xf32>
    %3 = tpu.matmul %2, %1, %cst {dimension_numbers = #tpu.dot_dimension_numbers<[1], [0], [0], [1], [0, 0, 1, 1], [], []>} : vector<64x6xbf16>, vector<6x256xbf16>, vector<64x256xf32> -> vector<64x256xf32>
    %c0_4 = arith.constant 0 : index
    %c0_5 = arith.constant 0 : index
    %4 = vector.load %arg4[%c0_4, %c0_5] : memref<64x1xf32, #tpu.memory_space<vmem>>, vector<64x1xf32>
    %5 = vector.broadcast %4 : vector<64x1xf32> to vector<64x256xf32>
    %6 = arith.addf %3, %5 : vector<64x256xf32>
    %cst_6 = arith.constant 0.000000e+00 : f32
    %7 = vector.broadcast %cst_6 : f32 to vector<64x256xf32>
    %8 = arith.maximumf %6, %7 : vector<64x256xf32>
    %c0_7 = arith.constant 0 : index
    %c0_8 = arith.constant 0 : index
    %9 = vector.load %arg5[%c0_7, %c0_8] : memref<21x64xbf16, #tpu.memory_space<vmem>>, vector<21x64xbf16>
    %10 = arith.truncf %8 : vector<64x256xf32> to vector<64x256xbf16>
    %cst_9 = arith.constant dense<0.000000e+00> : vector<21x256xf32>
    %11 = tpu.matmul %9, %10, %cst_9 {dimension_numbers = #tpu.dot_dimension_numbers<[1], [0], [0], [1], [0, 0, 1, 1], [], []>} : vector<21x64xbf16>, vector<64x256xbf16>, vector<21x256xf32> -> vector<21x256xf32>
    %c0_10 = arith.constant 0 : index
    %c0_11 = arith.constant 0 : index
    %12 = vector.load %arg6[%c0_10, %c0_11] : memref<21x1xf32, #tpu.memory_space<vmem>>, vector<21x1xf32>
    %13 = vector.broadcast %12 : vector<21x1xf32> to vector<21x256xf32>
    %14 = arith.addf %11, %13 : vector<21x256xf32>
    %15 = vector.extract_strided_slice %14 {offsets = [0, 0], sizes = [8, 256], strides = [1, 1]} : vector<21x256xf32> to vector<8x256xf32>
    %16 = tpu.iota {dimensions = array<i32: 0>} : vector<8x256xi32>
    %cst_12 = arith.constant dense<0xFF800000> : vector<256xf32>
    %17 = vector.multi_reduction <maximumf>, %15, %cst_12 [0] : vector<8x256xf32> to vector<256xf32>
    %18 = vector.shape_cast %17 : vector<256xf32> to vector<1x256xf32>
    %19 = vector.broadcast %18 : vector<1x256xf32> to vector<8x256xf32>
    %20 = arith.cmpf oeq, %15, %19 : vector<8x256xf32>
    %c8_i32 = arith.constant 8 : i32
    %21 = vector.broadcast %c8_i32 : i32 to vector<8x256xi32>
    %22 = arith.select %20, %16, %21 : vector<8x256xi1>, vector<8x256xi32>
    %cst_13 = arith.constant dense<2147483647> : vector<256xi32>
    %23 = vector.multi_reduction <minsi>, %22, %cst_13 [0] : vector<8x256xi32> to vector<256xi32>
    %24 = vector.shape_cast %23 : vector<256xi32> to vector<1x256xi32>
    %25 = vector.extract_strided_slice %14 {offsets = [8, 0], sizes = [8, 256], strides = [1, 1]} : vector<21x256xf32> to vector<8x256xf32>
    %26 = tpu.iota {dimensions = array<i32: 0>} : vector<8x256xi32>
    %cst_14 = arith.constant dense<0xFF800000> : vector<256xf32>
    %27 = vector.multi_reduction <maximumf>, %25, %cst_14 [0] : vector<8x256xf32> to vector<256xf32>
    %28 = vector.shape_cast %27 : vector<256xf32> to vector<1x256xf32>
    %29 = vector.broadcast %28 : vector<1x256xf32> to vector<8x256xf32>
    %30 = arith.cmpf oeq, %25, %29 : vector<8x256xf32>
    %c8_i32_15 = arith.constant 8 : i32
    %31 = vector.broadcast %c8_i32_15 : i32 to vector<8x256xi32>
    %32 = arith.select %30, %26, %31 : vector<8x256xi1>, vector<8x256xi32>
    %cst_16 = arith.constant dense<2147483647> : vector<256xi32>
    %33 = vector.multi_reduction <minsi>, %32, %cst_16 [0] : vector<8x256xi32> to vector<256xi32>
    %34 = vector.shape_cast %33 : vector<256xi32> to vector<1x256xi32>
    %c0_17 = arith.constant 0 : index
    %c0_18 = arith.constant 0 : index
    %c0_19 = arith.constant 0 : index
    %35 = vector.load %arg7[%c0_17, %c0_18, %c0_19] : memref<1x1x256xi32, #tpu.memory_space<vmem>>, vector<1x1x256xi32>
    %36 = vector.shape_cast %35 : vector<1x1x256xi32> to vector<1x256xi32>
    %37 = vector.shape_cast %24 : vector<1x256xi32> to vector<1x1x256xi32>
    tpu.vector_store %arg7[%c0_17, %c0_18, %c0_19], %37 {strides = array<i32>} : memref<1x1x256xi32, #tpu.memory_space<vmem>>, vector<1x1x256xi32>,
    %c1000_i32 = arith.constant 1000 : i32
    %38 = vector.broadcast %c1000_i32 : i32 to vector<1x256xi32>
    %39 = arith.muli %24, %38 : vector<1x256xi32>
    %c0_20 = arith.constant 0 : index
    %c0_21 = arith.constant 0 : index
    %c0_22 = arith.constant 0 : index
    %40 = vector.load %arg8[%c0_20, %c0_21, %c0_22] : memref<1x1x256xi32, #tpu.memory_space<vmem>>, vector<1x1x256xi32>
    %41 = vector.shape_cast %40 : vector<1x1x256xi32> to vector<1x256xi32>
    %42 = vector.shape_cast %39 : vector<1x256xi32> to vector<1x1x256xi32>
    tpu.vector_store %arg8[%c0_20, %c0_21, %c0_22], %42 {strides = array<i32>} : memref<1x1x256xi32, #tpu.memory_space<vmem>>, vector<1x1x256xi32>,
    %c1000_i32_23 = arith.constant 1000 : i32
    %43 = vector.broadcast %c1000_i32_23 : i32 to vector<1x256xi32>
    %44 = arith.muli %34, %43 : vector<1x256xi32>
    %c0_24 = arith.constant 0 : index
    %c0_25 = arith.constant 0 : index
    %c0_26 = arith.constant 0 : index
    %45 = vector.load %arg9[%c0_24, %c0_25, %c0_26] : memref<1x1x256xi32, #tpu.memory_space<vmem>>, vector<1x1x256xi32>
    %46 = vector.shape_cast %45 : vector<1x1x256xi32> to vector<1x256xi32>
    %47 = vector.shape_cast %44 : vector<1x256xi32> to vector<1x1x256xi32>
    tpu.vector_store %arg9[%c0_24, %c0_25, %c0_26], %47 {strides = array<i32>} : memref<1x1x256xi32, #tpu.memory_space<vmem>>, vector<1x1x256xi32>,
    %48 = vector.extract_strided_slice %14 {offsets = [16, 0], sizes = [1, 256], strides = [1, 1]} : vector<21x256xf32> to vector<1x256xf32>
    %c0_27 = arith.constant 0 : index
    %c0_28 = arith.constant 0 : index
    %c0_29 = arith.constant 0 : index
    %49 = vector.load %arg10[%c0_27, %c0_28, %c0_29] : memref<1x1x256xf32, #tpu.memory_space<vmem>>, vector<1x1x256xf32>
    %50 = vector.shape_cast %49 : vector<1x1x256xf32> to vector<1x256xf32>
    %51 = vector.shape_cast %48 : vector<1x256xf32> to vector<1x1x256xf32>
    tpu.vector_store %arg10[%c0_27, %c0_28, %c0_29], %51 {strides = array<i32>} : memref<1x1x256xf32, #tpu.memory_space<vmem>>, vector<1x1x256xf32>,
    %52 = vector.extract_strided_slice %14 {offsets = [17, 0], sizes = [2, 256], strides = [1, 1]} : vector<21x256xf32> to vector<2x256xf32>
    %c0_30 = arith.constant 0 : index
    %c0_31 = arith.constant 0 : index
    %c0_32 = arith.constant 0 : index
    %53 = vector.load %arg11[%c0_30, %c0_31, %c0_32] : memref<1x2x256xf32, #tpu.memory_space<vmem>>, vector<1x2x256xf32>
    %54 = vector.shape_cast %53 : vector<1x2x256xf32> to vector<2x256xf32>
    %55 = vector.shape_cast %52 : vector<2x256xf32> to vector<1x2x256xf32>
    tpu.vector_store %arg11[%c0_30, %c0_31, %c0_32], %55 {strides = array<i32>} : memref<1x2x256xf32, #tpu.memory_space<vmem>>, vector<1x2x256xf32>,
    %56 = vector.extract_strided_slice %14 {offsets = [19, 0], sizes = [2, 256], strides = [1, 1]} : vector<21x256xf32> to vector<2x256xf32>
    %c0_33 = arith.constant 0 : index
    %c0_34 = arith.constant 0 : index
    %c0_35 = arith.constant 0 : index
    %57 = vector.load %arg12[%c0_33, %c0_34, %c0_35] : memref<1x2x256xf32, #tpu.memory_space<vmem>>, vector<1x2x256xf32>
    %58 = vector.shape_cast %57 : vector<1x2x256xf32> to vector<2x256xf32>
    %59 = vector.shape_cast %56 : vector<2x256xf32> to vector<1x2x256xf32>
    tpu.vector_store %arg12[%c0_33, %c0_34, %c0_35], %59 {strides = array<i32>} : memref<1x2x256xf32, #tpu.memory_space<vmem>>, vector<1x2x256xf32>,
    return
  }
  func.func @transform_0(%arg0: i32, %arg1: i32) -> (i32, i32, i32) {
    %c0_i32 = arith.constant 0 : i32
    %c0_i32_0 = arith.constant 0 : i32
    return %arg0, %c0_i32, %arg1 : i32, i32, i32
  }
  func.func @transform_1(%arg0: i32, %arg1: i32) -> (i32, i32) {
    %c0_i32 = arith.constant 0 : i32
    %c0_i32_0 = arith.constant 0 : i32
    %c0_i32_1 = arith.constant 0 : i32
    return %c0_i32, %c0_i32_0 : i32, i32
  }
  func.func @transform_2(%arg0: i32, %arg1: i32) -> (i32, i32) {
    %c0_i32 = arith.constant 0 : i32
    %c0_i32_0 = arith.constant 0 : i32
    %c0_i32_1 = arith.constant 0 : i32
    return %c0_i32, %c0_i32_0 : i32, i32
  }
  func.func @transform_3(%arg0: i32, %arg1: i32) -> (i32, i32) {
    %c0_i32 = arith.constant 0 : i32
    %c0_i32_0 = arith.constant 0 : i32
    %c0_i32_1 = arith.constant 0 : i32
    return %c0_i32, %c0_i32_0 : i32, i32
  }
  func.func @transform_4(%arg0: i32, %arg1: i32) -> (i32, i32) {
    %c0_i32 = arith.constant 0 : i32
    %c0_i32_0 = arith.constant 0 : i32
    %c0_i32_1 = arith.constant 0 : i32
    return %c0_i32, %c0_i32_0 : i32, i32
  }
  func.func @transform_5(%arg0: i32, %arg1: i32) -> (i32, i32, i32) {
    %c0_i32 = arith.constant 0 : i32
    %c0_i32_0 = arith.constant 0 : i32
    return %arg0, %c0_i32, %arg1 : i32, i32, i32
  }
  func.func @transform_6(%arg0: i32, %arg1: i32) -> (i32, i32, i32) {
    %c0_i32 = arith.constant 0 : i32
    %c0_i32_0 = arith.constant 0 : i32
    return %arg0, %c0_i32, %arg1 : i32, i32, i32
  }
  func.func @transform_7(%arg0: i32, %arg1: i32) -> (i32, i32, i32) {
    %c0_i32 = arith.constant 0 : i32
    %c0_i32_0 = arith.constant 0 : i32
    return %arg0, %c0_i32, %arg1 : i32, i32, i32
  }
  func.func @transform_8(%arg0: i32, %arg1: i32) -> (i32, i32, i32) {
    %c0_i32 = arith.constant 0 : i32
    %c0_i32_0 = arith.constant 0 : i32
    return %arg0, %c0_i32, %arg1 : i32, i32, i32
  }
  func.func @transform_9(%arg0: i32, %arg1: i32) -> (i32, i32, i32) {
    %c0_i32 = arith.constant 0 : i32
    %c0_i32_0 = arith.constant 0 : i32
    return %arg0, %c0_i32, %arg1 : i32, i32, i32
  }
  func.func @transform_10(%arg0: i32, %arg1: i32) -> (i32, i32, i32) {
    %c0_i32 = arith.constant 0 : i32
    %c0_i32_0 = arith.constant 0 : i32
    return %arg0, %c0_i32, %arg1 : i32, i32, i32
  }
}

</mosaic_0001>

<llo_original>
// kernel: panoptic_forward.1
$region0: #{panoptic_forward.1}
  #allocation0 [shape = 'u32[]', space=smem, size = 0x4, offset = 0x4, fixed_abs, tag = 'smem constant byte address 0x4 - core index']
  #allocation1 [shape = 'u32[144,128]{1,0:T(1,128)}', space=vmem, size = 0x12000, scoped, tag = 'internal scratch']
  %s0 = inlined_call_operand.vmem [shape: bf16[2,6,256], index: 0, kind: input, shape index: {}]
  %s1 = inlined_call_operand.vmem [shape: bf16[64,6], index: 1, kind: input, shape index: {}]
  %s2 = inlined_call_operand.vmem [shape: f32[64,1], index: 2, kind: input, shape index: {}]
  %s3 = inlined_call_operand.vmem [shape: bf16[21,64], index: 3, kind: input, shape index: {}]
  %s4 = inlined_call_operand.vmem [shape: f32[21,1], index: 4, kind: input, shape index: {}]
  %s5 = inlined_call_operand.vmem [shape: s32[2,1,256], index: 5, kind: output, shape index: {0}]
  %s6 = inlined_call_operand.vmem [shape: s32[2,1,256], index: 6, kind: output, shape index: {1}]
  %s7 = inlined_call_operand.vmem [shape: s32[2,1,256], index: 7, kind: output, shape index: {2}]
  %s8 = inlined_call_operand.vmem [shape: f32[2,1,256], index: 8, kind: output, shape index: {3}]
  %s9 = inlined_call_operand.vmem [shape: f32[2,2,256], index: 9, kind: output, shape index: {4}]
  %s10 = inlined_call_operand.vmem [shape: f32[2,2,256], index: 10, kind: output, shape index: {5}]
  %11 = xla_tuple %s5, %s6, %s7, %s8, %s9, %s10
  %s12 = sld [smem:[#allocation0]]
  $region93: #{panoptic_forward.1} parent=0
    _
  %s14 = ssub.s32 1, %s12
  %s15 = scalar_select 0, %s14, %s12
  loop: start=0, step=1, limit=4
  $region2: #{panoptic_forward.1} parent=0 // loop_pre_header
    _
  $region3: #{panoptic_forward.1} parent=0 // loop_header
    %s17 = sphi 0, %s21
    %p18 = scmp.ge.s32.totalorder %s17, 4
    %s24 = sphi 0, %s36
    %s25 = sphi 0, %s32
    %s26 = sphi 0, %s24
    %s27 = sphi 0, %s25
    %s28 = sphi 0, %s26
    %s29 = sphi 0, %s27
    %s41 = sphi 0, %s43
    %s44 = sphi 0, %s41
    %s45 = sphi 0, %s44
    %s61 = sphi 0, %s45
    %s65 = sphi 0, %s65
    %s67 = sphi 0, %s65
    %s68 = sphi 0, %s67
    %s82 = sphi 0, %s68
    %s86 = sphi 0, %s86
    %s88 = sphi 0, %s86
    %s89 = sphi 0, %s88
    %s103 = sphi 0, %s89
    %s107 = sphi 0, %s107
    %s109 = sphi 0, %s107
    %s110 = sphi 0, %s109
    %s124 = sphi 0, %s110
    %s128 = sphi 0, %s128
    %s130 = sphi 0, %s128
    %s131 = sphi 0, %s130
    %s145 = sphi 0, %s131
    %s153 = sphi 0, %s155
    %s156 = sphi 0, %s153
    %s157 = sphi 0, %s156
    %s173 = sphi 0, %s157
    %s181 = sphi 0, %s183
    %s184 = sphi 0, %s181
    %s185 = sphi 0, %s184
    %s201 = sphi 0, %s185
    %s209 = sphi 0, %s211
    %s212 = sphi 0, %s209
    %s213 = sphi 0, %s212
    %s229 = sphi 0, %s213
    %s237 = sphi 0, %s239
    %s240 = sphi 0, %s237
    %s241 = sphi 0, %s240
    %s257 = sphi 0, %s241
    %s265 = sphi 0, %s267
    %s268 = sphi 0, %s265
    %s269 = sphi 0, %s268
    %s285 = sphi 0, %s269
    %s293 = sphi 0, %s295
    %s296 = sphi 0, %s293
    %s297 = sphi 0, %s296
    %s313 = sphi 0, %s297
  $region4: #{panoptic_forward.1} parent=0 // loop_header_branch
    %20 = sbr.rel (%p18) target = $region8
  $region5: #{panoptic_forward.1} parent=0 // loop_body
    %s22 = ssub.s32 %s17, 1
    %s23 = ssub.s32 %s17, 2
    %s30 = sadd.s32 1, %s25
    %p31 = scmp.ge.s32.totalorder %s30, 1
    %s32 = scalar_select %p31, 0, %s30
    %s33 = sadd.s32 1, %s24
    %s34 = scalar_select %p31, %s33, %s24
    %p35 = scmp.ge.s32.totalorder %s34, 2
    %s36 = scalar_select %p35, 0, %s34
    %s37 = ssub.s32 %s24, %s36
    %s38 = ssub.s32 %s25, %s32
    %s39 = sor.u32 %s37, %s38
    %p40 = scmp.eq.s32.totalorder %s39, 0
    %s42 = sadd.s32 %s41, 1
    %s43 = scalar_select %p40, %s41, %s42
    %p46 = pneg %p40
    %p47 = scmp.eq.s32.totalorder %s17, 1
    %p48 = por %p46, %p47
    %p49 = scmp.ne.s32.totalorder %s41, %s44
    %p50 = scmp.eq.s32.totalorder %s17, 0
    %p51 = por %p49, %p50
    %p52 = scmp.ne.s32.totalorder %s41, %s44
    %p53 = scmp.eq.s32.totalorder %s22, 1
    %p54 = por %p52, %p53
    %p55 = scmp.ne.s32.totalorder %s44, %s45
    %p56 = scmp.eq.s32.totalorder %s22, 0
    %p57 = por %p55, %p56
    %p58 = scmp.ne.s32.totalorder %s44, %s45
    %p59 = scmp.eq.s32.totalorder %s23, 1
    %p60 = por %p58, %p59
    %p62 = scmp.ne.s32.totalorder %s45, %s61
    %p63 = scmp.eq.s32.totalorder %s23, 0
    %p64 = por %p62, %p63
    %s66 = sadd.s32 %s65, 1
    %p69 = scmp.eq.s32.totalorder %s17, 1
    %p70 = scmp.ne.s32.totalorder %s65, %s67
    %p71 = scmp.eq.s32.totalorder %s17, 0
    %p72 = por %p70, %p71
    %p73 = scmp.ne.s32.totalorder %s65, %s67
    %p74 = scmp.eq.s32.totalorder %s22, 1
    %p75 = por %p73, %p74
    %p76 = scmp.ne.s32.totalorder %s67, %s68
    %p77 = scmp.eq.s32.totalorder %s22, 0
    %p78 = por %p76, %p77
    %p79 = scmp.ne.s32.totalorder %s67, %s68
    %p80 = scmp.eq.s32.totalorder %s23, 1
    %p81 = por %p79, %p80
    %p83 = scmp.ne.s32.totalorder %s68, %s82
    %p84 = scmp.eq.s32.totalorder %s23, 0
    %p85 = por %p83, %p84
    %s87 = sadd.s32 %s86, 1
    %p90 = scmp.eq.s32.totalorder %s17, 1
    %p91 = scmp.ne.s32.totalorder %s86, %s88
    %p92 = scmp.eq.s32.totalorder %s17, 0
    %p93 = por %p91, %p92
    %p94 = scmp.ne.s32.totalorder %s86, %s88
    %p95 = scmp.eq.s32.totalorder %s22, 1
    %p96 = por %p94, %p95
    %p97 = scmp.ne.s32.totalorder %s88, %s89
    %p98 = scmp.eq.s32.totalorder %s22, 0
    %p99 = por %p97, %p98
    %p100 = scmp.ne.s32.totalorder %s88, %s89
    %p101 = scmp.eq.s32.totalorder %s23, 1
    %p102 = por %p100, %p101
    %p104 = scmp.ne.s32.totalorder %s89, %s103
    %p105 = scmp.eq.s32.totalorder %s23, 0
    %p106 = por %p104, %p105
    %s108 = sadd.s32 %s107, 1
    %p111 = scmp.eq.s32.totalorder %s17, 1
    %p112 = scmp.ne.s32.totalorder %s107, %s109
    %p113 = scmp.eq.s32.totalorder %s17, 0
    %p114 = por %p112, %p113
    %p115 = scmp.ne.s32.totalorder %s107, %s109
    %p116 = scmp.eq.s32.totalorder %s22, 1
    %p117 = por %p115, %p116
    %p118 = scmp.ne.s32.totalorder %s109, %s110
    %p119 = scmp.eq.s32.totalorder %s22, 0
    %p120 = por %p118, %p119
    %p121 = scmp.ne.s32.totalorder %s109, %s110
    %p122 = scmp.eq.s32.totalorder %s23, 1
    %p123 = por %p121, %p122
    %p125 = scmp.ne.s32.totalorder %s110, %s124
    %p126 = scmp.eq.s32.totalorder %s23, 0
    %p127 = por %p125, %p126
    %s129 = sadd.s32 %s128, 1
    %p132 = scmp.eq.s32.totalorder %s17, 1
    %p133 = scmp.ne.s32.totalorder %s128, %s130
    %p134 = scmp.eq.s32.totalorder %s17, 0
    %p135 = por %p133, %p134
    %p136 = scmp.ne.s32.totalorder %s128, %s130
    %p137 = scmp.eq.s32.totalorder %s22, 1
    %p138 = por %p136, %p137
    %p139 = scmp.ne.s32.totalorder %s130, %s131
    %p140 = scmp.eq.s32.totalorder %s22, 0
    %p141 = por %p139, %p140
    %p142 = scmp.ne.s32.totalorder %s130, %s131
    %p143 = scmp.eq.s32.totalorder %s23, 1
    %p144 = por %p142, %p143
    %p146 = scmp.ne.s32.totalorder %s131, %s145
    %p147 = scmp.eq.s32.totalorder %s23, 0
    %p148 = por %p146, %p147
    %s149 = ssub.s32 %s24, %s36
    %s150 = ssub.s32 %s25, %s32
    %s151 = sor.u32 %s149, %s150
    %p152 = scmp.eq.s32.totalorder %s151, 0
    %s154 = sadd.s32 %s153, 1
    %s155 = scalar_select %p152, %s153, %s154
    %p158 = pneg %p152
    %p159 = scmp.eq.s32.totalorder %s17, 1
    %p160 = por %p158, %p159
    %p161 = scmp.ne.s32.totalorder %s153, %s156
    %p162 = scmp.eq.s32.totalorder %s17, 0
    %p163 = por %p161, %p162
    %p164 = scmp.ne.s32.totalorder %s153, %s156
    %p165 = scmp.eq.s32.totalorder %s22, 1
    %p166 = por %p164, %p165
    %p167 = scmp.ne.s32.totalorder %s156, %s157
    %p168 = scmp.eq.s32.totalorder %s22, 0
    %p169 = por %p167, %p168
    %p170 = scmp.ne.s32.totalorder %s156, %s157
    %p171 = scmp.eq.s32.totalorder %s23, 1
    %p172 = por %p170, %p171
    %p174 = scmp.ne.s32.totalorder %s157, %s173
    %p175 = scmp.eq.s32.totalorder %s23, 0
    %p176 = por %p174, %p175
    %s177 = ssub.s32 %s24, %s36
    %s178 = ssub.s32 %s25, %s32
    %s179 = sor.u32 %s177, %s178
    %p180 = scmp.eq.s32.totalorder %s179, 0
    %s182 = sadd.s32 %s181, 1
    %s183 = scalar_select %p180, %s181, %s182
    %p186 = pneg %p180
    %p187 = scmp.eq.s32.totalorder %s17, 1
    %p188 = por %p186, %p187
    %p189 = scmp.ne.s32.totalorder %s181, %s184
    %p190 = scmp.eq.s32.totalorder %s17, 0
    %p191 = por %p189, %p190
    %p192 = scmp.ne.s32.totalorder %s181, %s184
    %p193 = scmp.eq.s32.totalorder %s22, 1
    %p194 = por %p192, %p193
    %p195 = scmp.ne.s32.totalorder %s184, %s185
    %p196 = scmp.eq.s32.totalorder %s22, 0
    %p197 = por %p195, %p196
    %p198 = scmp.ne.s32.totalorder %s184, %s185
    %p199 = scmp.eq.s32.totalorder %s23, 1
    %p200 = por %p198, %p199
    %p202 = scmp.ne.s32.totalorder %s185, %s201
    %p203 = scmp.eq.s32.totalorder %s23, 0
    %p204 = por %p202, %p203
    %s205 = ssub.s32 %s24, %s36
    %s206 = ssub.s32 %s25, %s32
    %s207 = sor.u32 %s205, %s206
    %p208 = scmp.eq.s32.totalorder %s207, 0
    %s210 = sadd.s32 %s209, 1
    %s211 = scalar_select %p208, %s209, %s210
    %p214 = pneg %p208
    %p215 = scmp.eq.s32.totalorder %s17, 1
    %p216 = por %p214, %p215
    %p217 = scmp.ne.s32.totalorder %s209, %s212
    %p218 = scmp.eq.s32.totalorder %s17, 0
    %p219 = por %p217, %p218
    %p220 = scmp.ne.s32.totalorder %s209, %s212
    %p221 = scmp.eq.s32.totalorder %s22, 1
    %p222 = por %p220, %p221
    %p223 = scmp.ne.s32.totalorder %s212, %s213
    %p224 = scmp.eq.s32.totalorder %s22, 0
    %p225 = por %p223, %p224
    %p226 = scmp.ne.s32.totalorder %s212, %s213
    %p227 = scmp.eq.s32.totalorder %s23, 1
    %p228 = por %p226, %p227
    %p230 = scmp.ne.s32.totalorder %s213, %s229
    %p231 = scmp.eq.s32.totalorder %s23, 0
    %p232 = por %p230, %p231
    %s233 = ssub.s32 %s24, %s36
    %s234 = ssub.s32 %s25, %s32
    %s235 = sor.u32 %s233, %s234
    %p236 = scmp.eq.s32.totalorder %s235, 0
    %s238 = sadd.s32 %s237, 1
    %s239 = scalar_select %p236, %s237, %s238
    %p242 = pneg %p236
    %p243 = scmp.eq.s32.totalorder %s17, 1
    %p244 = por %p242, %p243
    %p245 = scmp.ne.s32.totalorder %s237, %s240
    %p246 = scmp.eq.s32.totalorder %s17, 0
    %p247 = por %p245, %p246
    %p248 = scmp.ne.s32.totalorder %s237, %s240
    %p249 = scmp.eq.s32.totalorder %s22, 1
    %p250 = por %p248, %p249
    %p251 = scmp.ne.s32.totalorder %s240, %s241
    %p252 = scmp.eq.s32.totalorder %s22, 0
    %p253 = por %p251, %p252
    %p254 = scmp.ne.s32.totalorder %s240, %s241
    %p255 = scmp.eq.s32.totalorder %s23, 1
    %p256 = por %p254, %p255
    %p258 = scmp.ne.s32.totalorder %s241, %s257
    %p259 = scmp.eq.s32.totalorder %s23, 0
    %p260 = por %p258, %p259
    %s261 = ssub.s32 %s24, %s36
    %s262 = ssub.s32 %s25, %s32
    %s263 = sor.u32 %s261, %s262
    %p264 = scmp.eq.s32.totalorder %s263, 0
    %s266 = sadd.s32 %s265, 1
    %s267 = scalar_select %p264, %s265, %s266
    %p270 = pneg %p264
    %p271 = scmp.eq.s32.totalorder %s17, 1
    %p272 = por %p270, %p271
    %p273 = scmp.ne.s32.totalorder %s265, %s268
    %p274 = scmp.eq.s32.totalorder %s17, 0
    %p275 = por %p273, %p274
    %p276 = scmp.ne.s32.totalorder %s265, %s268
    %p277 = scmp.eq.s32.totalorder %s22, 1
    %p278 = por %p276, %p277
    %p279 = scmp.ne.s32.totalorder %s268, %s269
    %p280 = scmp.eq.s32.totalorder %s22, 0
    %p281 = por %p279, %p280
    %p282 = scmp.ne.s32.totalorder %s268, %s269
    %p283 = scmp.eq.s32.totalorder %s23, 1
    %p284 = por %p282, %p283
    %p286 = scmp.ne.s32.totalorder %s269, %s285
    %p287 = scmp.eq.s32.totalorder %s23, 0
    %p288 = por %p286, %p287
    %s289 = ssub.s32 %s24, %s36
    %s290 = ssub.s32 %s25, %s32
    %s291 = sor.u32 %s289, %s290
    %p292 = scmp.eq.s32.totalorder %s291, 0
    %s294 = sadd.s32 %s293, 1
    %s295 = scalar_select %p292, %s293, %s294
    %p298 = pneg %p292
    %p299 = scmp.eq.s32.totalorder %s17, 1
    %p300 = por %p298, %p299
    %p301 = scmp.ne.s32.totalorder %s293, %s296
    %p302 = scmp.eq.s32.totalorder %s17, 0
    %p303 = por %p301, %p302
    %p304 = scmp.ne.s32.totalorder %s293, %s296
    %p305 = scmp.eq.s32.totalorder %s22, 1
    %p306 = por %p304, %p305
    %p307 = scmp.ne.s32.totalorder %s296, %s297
    %p308 = scmp.eq.s32.totalorder %s22, 0
    %p309 = por %p307, %p308
    %p310 = scmp.ne.s32.totalorder %s296, %s297
    %p311 = scmp.eq.s32.totalorder %s23, 1
    %p312 = por %p310, %p311
    %p314 = scmp.ne.s32.totalorder %s297, %s313
    %p315 = scmp.eq.s32.totalorder %s23, 0
    %p316 = por %p314, %p315
    %p317 = scmp.le.s32.totalorder 1, %s17
    %p318 = scmp.lt.s32.totalorder %s17, 3
    %p319 = pnand %p317, %p318
    %p320 = pneg %p319
    // Predicated region
    $region9: #{panoptic_forward.1} parent=5 // pred_check
      _
    $region10: #{panoptic_forward.1} parent=5 // pred_check_branch
      %322 = sbr.rel (%p319) target = $region12
    $region11: #{panoptic_forward.1} parent=5 // pred_region
      %s323 = ssub.s32 %s17, 1
      // Predicated region
      $region13: #{panoptic_forward.1} parent=11 // pred_check
        %p324 = pneg %p78
      $region14: #{panoptic_forward.1} parent=11 // pred_check_branch
        %326 = sbr.rel (%p324) target = $region16
      $region15: #{panoptic_forward.1} parent=11 // pred_region
        _
      $region16: #{panoptic_forward.1} parent=11 // pred_fallthru
        _
      // Predicated region
      $region17: #{panoptic_forward.1} parent=11 // pred_check
        %p327 = pneg %p99
      $region18: #{panoptic_forward.1} parent=11 // pred_check_branch
        %329 = sbr.rel (%p327) target = $region20
      $region19: #{panoptic_forward.1} parent=11 // pred_region
        _
      $region20: #{panoptic_forward.1} parent=11 // pred_fallthru
        _
      // Predicated region
      $region21: #{panoptic_forward.1} parent=11 // pred_check
        %p330 = pneg %p120
      $region22: #{panoptic_forward.1} parent=11 // pred_check_branch
        %332 = sbr.rel (%p330) target = $region24
      $region23: #{panoptic_forward.1} parent=11 // pred_region
        _
      $region24: #{panoptic_forward.1} parent=11 // pred_fallthru
        _
      // Predicated region
      $region25: #{panoptic_forward.1} parent=11 // pred_check
        %p333 = pneg %p141
      $region26: #{panoptic_forward.1} parent=11 // pred_check_branch
        %335 = sbr.rel (%p333) target = $region28
      $region27: #{panoptic_forward.1} parent=11 // pred_region
        _
      $region28: #{panoptic_forward.1} parent=11 // pred_fallthru
        _
    $region12: #{panoptic_forward.1} parent=5 // pred_fallthru
      _
    %p336 = scmp.lt.s32.totalorder %s17, 2
    // Predicated region
    $region29: #{panoptic_forward.1} parent=5 // pred_check
      %p337 = pneg %p336
    $region30: #{panoptic_forward.1} parent=5 // pred_check_branch
      %339 = sbr.rel (%p337) target = $region32
    $region31: #{panoptic_forward.1} parent=5 // pred_region
      // Predicated region
      $region33: #{panoptic_forward.1} parent=31 // pred_check
        %p340 = pneg %p51
      $region34: #{panoptic_forward.1} parent=31 // pred_check_branch
        %342 = sbr.rel (%p340) target = $region36
      $region35: #{panoptic_forward.1} parent=31 // pred_region
        %s343 = smul.u32 2, %s25
        %p344 = scmp.lt.s32.totalorder %s24, 1
        %s345 = scalar_select %p344, %s24, 1
        %p346 = scmp.lt.s32.totalorder %s343, 1
        %s347 = scalar_select %p346, %s343, 1
        %s348 = smul.addr %s345, 2
        %s349 = sadd.s32 %s347, %s348
        %s350 = smul.addr %s349, 4
        %s351 = scalar_lea.vmem %s0, %s350
        %s352 = smul.u32 2, %s25
      $region36: #{panoptic_forward.1} parent=31 // pred_fallthru
        _
    $region32: #{panoptic_forward.1} parent=5 // pred_fallthru
      _
    %p353 = scmp.le.s32.totalorder 1, %s17
    %p354 = scmp.lt.s32.totalorder %s17, 3
    %p355 = pnand %p353, %p354
    %p356 = pneg %p355
    // Predicated region
    $region37: #{panoptic_forward.1} parent=5 // pred_check
      _
    $region38: #{panoptic_forward.1} parent=5 // pred_check_branch
      %358 = sbr.rel (%p355) target = $region40
    $region39: #{panoptic_forward.1} parent=5 // pred_region
      %s359 = ssub.s32 %s17, 1
      %s360 = smul.u32 2, %s27
      %p361 = scmp.lt.s32.totalorder %s26, 1
      %s362 = scalar_select %p361, %s26, 1
      %p363 = scmp.lt.s32.totalorder %s360, 1
      %s364 = scalar_select %p363, %s360, 1
      %s365 = smul.addr %s362, 2
      %s366 = sadd.s32 %s364, %s365
      %s367 = smul.addr %s366, 4
      %s368 = scalar_lea.vmem %s0, %s367
      %p369 = pneg %p57
      %p370 = pneg %p54
      %p371 = pneg %p78
      %p372 = pneg %p75
      %p373 = pneg %p99
      %p374 = pneg %p96
      %p375 = pneg %p120
      %p376 = pneg %p117
      %p377 = pneg %p141
      %p378 = pneg %p138
      %p379 = pneg %p169
      %p380 = pneg %p166
      %s381 = smul.u32 2, %s27
      %p382 = scmp.lt.s32.totalorder %s26, 1
      %s383 = scalar_select %p382, %s26, 1
      %p384 = scmp.lt.s32.totalorder %s381, 1
      %s385 = scalar_select %p384, %s381, 1
      %s386 = smul.addr %s383, 2
      %s387 = sadd.s32 %s385, %s386
      %s388 = scalar_lea.vmem %s5, %s387
      %p389 = pneg %p197
      %p390 = pneg %p194
      %s391 = smul.u32 2, %s27
      %p392 = scmp.lt.s32.totalorder %s26, 1
      %s393 = scalar_select %p392, %s26, 1
      %p394 = scmp.lt.s32.totalorder %s391, 1
      %s395 = scalar_select %p394, %s391, 1
      %s396 = smul.addr %s393, 2
      %s397 = sadd.s32 %s395, %s396
      %s398 = scalar_lea.vmem %s6, %s397
      %p399 = pneg %p225
      %p400 = pneg %p222
      %s401 = smul.u32 2, %s27
      %p402 = scmp.lt.s32.totalorder %s26, 1
      %s403 = scalar_select %p402, %s26, 1
      %p404 = scmp.lt.s32.totalorder %s401, 1
      %s405 = scalar_select %p404, %s401, 1
      %s406 = smul.addr %s403, 2
      %s407 = sadd.s32 %s405, %s406
      %s408 = scalar_lea.vmem %s7, %s407
      %p409 = pneg %p253
      %p410 = pneg %p250
      %s411 = smul.u32 2, %s27
      %p412 = scmp.lt.s32.totalorder %s26, 1
      %s413 = scalar_select %p412, %s26, 1
      %p414 = scmp.lt.s32.totalorder %s411, 1
      %s415 = scalar_select %p414, %s411, 1
      %s416 = smul.addr %s413, 2
      %s417 = sadd.s32 %s415, %s416
      %s418 = scalar_lea.vmem %s8, %s417
      %p419 = pneg %p281
      %p420 = pneg %p278
      %s421 = smul.u32 2, %s27
      %p422 = scmp.lt.s32.totalorder %s26, 1
      %s423 = scalar_select %p422, %s26, 1
      %p424 = scmp.lt.s32.totalorder %s421, 1
      %s425 = scalar_select %p424, %s421, 1
      %s426 = smul.addr %s423, 2
      %s427 = sadd.s32 %s425, %s426
      %s428 = smul.addr %s427, 2
      %s429 = scalar_lea.vmem %s9, %s428
      %p430 = pneg %p309
      %p431 = pneg %p306
      %s432 = smul.u32 2, %s27
      %p433 = scmp.lt.s32.totalorder %s26, 1
      %s434 = scalar_select %p433, %s26, 1
      %p435 = scmp.lt.s32.totalorder %s432, 1
      %s436 = scalar_select %p435, %s432, 1
      %s437 = smul.addr %s434, 2
      %s438 = sadd.s32 %s436, %s437
      %s439 = smul.addr %s438, 2
      %s440 = scalar_lea.vmem %s10, %s439
      %s441 = smul.u32 2, %s27
      %p442 = scmp.lt.s32.totalorder %s26, 1
      %s443 = scalar_select %p442, %s26, 1
      %p444 = scmp.lt.s32.totalorder %s441, 1
      %s445 = scalar_select %p444, %s441, 1
      %s446 = smul.addr %s443, 2
      %s447 = sadd.s32 %s445, %s446
      %s448 = smul.addr %s447, 4
      %s449 = scalar_lea.vmem %s0, %s448
      %s450 = smul.u32 2, %s27
      %s451 = smul.u32 2, %s27
      %p452 = scmp.lt.s32.totalorder %s26, 1
      %s453 = scalar_select %p452, %s26, 1
      %p454 = scmp.lt.s32.totalorder %s451, 1
      %s455 = scalar_select %p454, %s451, 1
      %s456 = smul.addr %s453, 2
      %s457 = sadd.s32 %s455, %s456
      %s458 = scalar_lea.vmem %s5, %s457
      %s459 = smul.u32 2, %s27
      %s460 = smul.u32 2, %s27
      %p461 = scmp.lt.s32.totalorder %s26, 1
      %s462 = scalar_select %p461, %s26, 1
      %p463 = scmp.lt.s32.totalorder %s460, 1
      %s464 = scalar_select %p463, %s460, 1
      %s465 = smul.addr %s462, 2
      %s466 = sadd.s32 %s464, %s465
      %s467 = scalar_lea.vmem %s6, %s466
      %s468 = smul.u32 2, %s27
      %s469 = smul.u32 2, %s27
      %p470 = scmp.lt.s32.totalorder %s26, 1
      %s471 = scalar_select %p470, %s26, 1
      %p472 = scmp.lt.s32.totalorder %s469, 1
      %s473 = scalar_select %p472, %s469, 1
      %s474 = smul.addr %s471, 2
      %s475 = sadd.s32 %s473, %s474
      %s476 = scalar_lea.vmem %s7, %s475
      %s477 = smul.u32 2, %s27
      %s478 = smul.u32 2, %s27
      %p479 = scmp.lt.s32.totalorder %s26, 1
      %s480 = scalar_select %p479, %s26, 1
      %p481 = scmp.lt.s32.totalorder %s478, 1
      %s482 = scalar_select %p481, %s478, 1
      %s483 = smul.addr %s480, 2
      %s484 = sadd.s32 %s482, %s483
      %s485 = scalar_lea.vmem %s8, %s484
      %s486 = smul.u32 2, %s27
      %s487 = smul.u32 2, %s27
      %p488 = scmp.lt.s32.totalorder %s26, 1
      %s489 = scalar_select %p488, %s26, 1
      %p490 = scmp.lt.s32.totalorder %s487, 1
      %s491 = scalar_select %p490, %s487, 1
      %s492 = smul.addr %s489, 2
      %s493 = sadd.s32 %s491, %s492
      %s494 = smul.addr %s493, 2
      %s495 = scalar_lea.vmem %s9, %s494
      %s496 = smul.u32 2, %s27
      %s497 = smul.u32 2, %s27
      %p498 = scmp.lt.s32.totalorder %s26, 1
      %s499 = scalar_select %p498, %s26, 1
      %p500 = scmp.lt.s32.totalorder %s497, 1
      %s501 = scalar_select %p500, %s497, 1
      %s502 = smul.addr %s499, 2
      %s503 = sadd.s32 %s501, %s502
      %s504 = smul.addr %s503, 2
      %s505 = scalar_lea.vmem %s10, %s504
      %s506 = smul.u32 2, %s27
      %v508 = vld [vmem:[%s449] sm:$0x77]
      %v509 = vld [vmem:[%s1] sm:$0xf]
      %v510 = vld [vmem:[%s1 + $0x4] sm:$0xf]
      %v511 = vld [vmem:[%s1 + $0x8] sm:$0xf]
      %v512 = vld [vmem:[%s1 + $0xc] sm:$0xf]
      %v513 = vld [vmem:[%s1 + $0x10] sm:$0xf]
      %v514 = vld [vmem:[%s1 + $0x14] sm:$0xf]
      %v515 = vld [vmem:[%s1 + $0x18] sm:$0xf]
      %v516 = vld [vmem:[%s1 + $0x1c] sm:$0xf]
      %v517 = vld [vmem:[%s2] sm:$0xff]
      %v518 = vld [vmem:[%s2 + $0x8] sm:$0xff]
      %v519 = vld [vmem:[%s2 + $0x10] sm:$0xff]
      %v520 = vld [vmem:[%s2 + $0x18] sm:$0xff]
      %v521 = vld [vmem:[%s2 + $0x20] sm:$0xff]
      %v522 = vld [vmem:[%s2 + $0x28] sm:$0xff]
      %v523 = vld [vmem:[%s2 + $0x30] sm:$0xff]
      %v524 = vld [vmem:[%s2 + $0x38] sm:$0xff]
      %526 = vset.pattern.permute.xlu0 0
      %527 = vperm.xlu0 %526, %v517
      %v528 = vpop.permute.xlu0 %527
      %531 = vset.pattern.permute.xlu0 0
      %532 = vperm.xlu0 %531, %v518
      %v533 = vpop.permute.xlu0 %532
      %536 = vset.pattern.permute.xlu0 0
      %537 = vperm.xlu0 %536, %v519
      %v538 = vpop.permute.xlu0 %537
      %541 = vset.pattern.permute.xlu0 0
      %542 = vperm.xlu0 %541, %v520
      %v543 = vpop.permute.xlu0 %542
      %546 = vset.pattern.permute.xlu0 0
      %547 = vperm.xlu0 %546, %v521
      %v548 = vpop.permute.xlu0 %547
      %551 = vset.pattern.permute.xlu0 0
      %552 = vperm.xlu0 %551, %v522
      %v553 = vpop.permute.xlu0 %552
      %556 = vset.pattern.permute.xlu0 0
      %557 = vperm.xlu0 %556, %v523
      %v558 = vpop.permute.xlu0 %557
      %561 = vset.pattern.permute.xlu0 0
      %562 = vperm.xlu0 %561, %v524
      %v563 = vpop.permute.xlu0 %562
      %v573 = vunpack.c.l.b16 %v509
      %v574 = vunpack.c.l.b16 %v510
      %v575 = vunpack.c.l.b16 %v511
      %v576 = vunpack.c.l.b16 %v512
      %v577 = vunpack.c.l.b16 %v513
      %v578 = vunpack.c.l.b16 %v514
      %v579 = vunpack.c.l.b16 %v515
      %v580 = vunpack.c.l.b16 %v516
      %v581 = vpack.c.b16 %v574, %v573
      %v582 = vpack.c.b16 %v576, %v575
      %v583 = vpack.c.b16 %v578, %v577
      %v584 = vpack.c.b16 %v580, %v579
      %v586 = vunpack.c.l.b16 %v508
      %v587 = vunpack.c.h.b16 %v508
      %v588 = vpack.c.b16 %v586, %v586
      %v589 = vpack.c.b16 %v587, %v587
      %vm590 = vcmask 48128
      %v592 = vsel %vm590, %v581, 0
      %v595 = vsel %vm590, %v582, 0
      %v598 = vsel %vm590, %v583, 0
      %v601 = vsel %vm590, %v584, 0
      %vm603 = vcmask 1042432
      %v605 = vsel %vm603, %v588, 0
      %v608 = vsel %vm603, %v589, 0
      %610 = vmatprep.subr.bf16.mxu0 0
      %611 = vmatpush1.bf16.msra.mxu0 0
      %612 = vmatprep.subr.bf16.mxu0 0
      %613 = vmatpush1.bf16.msra.mxu0 0
      %614 = vmatprep.subr.bf16.mxu0 0
      %615 = vmatpush1.bf16.msra.mxu0 0
      %616 = vmatprep.subr.bf16.mxu0 0
      %617 = vmatpush1.bf16.msra.mxu0 0
      %618 = vmatprep.subr.bf16.mxu0 0
      %619 = vmatpush1.bf16.msra.mxu0 0
      %620 = vmatprep.subr.bf16.mxu0 0
      %621 = vmatpush1.bf16.msra.mxu0 0
      %622 = vmatprep.subr.bf16.mxu0 0
      %623 = vmatpush1.bf16.msra.mxu0 0
      %624 = vmatprep.subr.bf16.mxu0 %v608
      %625 = vmatpush1.bf16.msra.mxu0 %v605
      %626 = vmatprep.subr.bf16.mxu0 0
      %627 = vmatpush2.bf16.msra.mxu0 0
      %628 = vmatprep.subr.bf16.mxu0 0
      %629 = vmatpush2.bf16.msra.mxu0 0
      %630 = vmatprep.subr.bf16.mxu0 0
      %631 = vmatpush2.bf16.msra.mxu0 0
      %632 = vmatprep.subr.bf16.mxu0 0
      %633 = vmatpush2.bf16.msra.mxu0 0
      %634 = vmatprep.subr.bf16.mxu0 0
      %635 = vmatpush2.bf16.msra.mxu0 0
      %636 = vmatprep.subr.bf16.mxu0 0
      %637 = vmatpush2.bf16.msra.mxu0 0
      %638 = vmatprep.subr.bf16.mxu0 0
      %639 = vmatpush2.bf16.msra.mxu0 0
      %640 = vmatprep.subr.bf16.mxu0 0
      %641 = vmatpush2.bf16.msra.mxu0 0
      %642 = vmatprep.mubr.bf16.mxu0 0
      %643 = vmatmul.mubr.bf16.gmra.mxu0 %v592
      %v644 = vpop.f32.mrf.mxu0
      %v645 = vadd.f32 %v528, %v644
      %v646 = vpop.f32.mrf.mxu0
      %v647 = vadd.f32 %v528, %v646
      %v648 = vpop.f32.mrf.mxu0
      %v649 = vadd.f32 %v533, %v648
      %v650 = vpop.f32.mrf.mxu0
      %v651 = vadd.f32 %v533, %v650
      %652 = vmatprep.mubr.bf16.mxu0 0
      %653 = vmatmul.mubr.bf16.gmra.mxu0 %v595
      %v654 = vpop.f32.mrf.mxu0
      %v655 = vadd.f32 %v538, %v654
      %v656 = vpop.f32.mrf.mxu0
      %v657 = vadd.f32 %v538, %v656
      %v658 = vpop.f32.mrf.mxu0
      %v659 = vadd.f32 %v543, %v658
      %v660 = vpop.f32.mrf.mxu0
      %v661 = vadd.f32 %v543, %v660
      %662 = vmatprep.mubr.bf16.mxu0 0
      %663 = vmatmul.mubr.bf16.gmra.mxu0 %v598
      %v664 = vpop.f32.mrf.mxu0
      %v665 = vadd.f32 %v548, %v664
      %v666 = vpop.f32.mrf.mxu0
      %v667 = vadd.f32 %v548, %v666
      %v668 = vpop.f32.mrf.mxu0
      %v669 = vadd.f32 %v553, %v668
      %v670 = vpop.f32.mrf.mxu0
      %v671 = vadd.f32 %v553, %v670
      %672 = vmatprep.mubr.bf16.mxu0 0
      %673 = vmatmul.mubr.bf16.gmra.mxu0 %v601
      %v674 = vpop.f32.mrf.mxu0
      %v675 = vadd.f32 %v558, %v674
      %v676 = vpop.f32.mrf.mxu0
      %v677 = vadd.f32 %v558, %v676
      %v678 = vpop.f32.mrf.mxu0
      %v679 = vadd.f32 %v563, %v678
      %v680 = vpop.f32.mrf.mxu0
      %v681 = vadd.f32 %v563, %v680
      %682 = vdwg.mxu0
      %v683 = vmax.f32 %v645, 0.0
      %v684 = vmax.f32 %v647, 0.0
      %v685 = vmax.f32 %v649, 0.0
      %v686 = vmax.f32 %v651, 0.0
      %v687 = vmax.f32 %v655, 0.0
      %v688 = vmax.f32 %v657, 0.0
      %v689 = vmax.f32 %v659, 0.0
      %v690 = vmax.f32 %v661, 0.0
      %v691 = vmax.f32 %v665, 0.0
      %v692 = vmax.f32 %v667, 0.0
      %v693 = vmax.f32 %v669, 0.0
      %v694 = vmax.f32 %v671, 0.0
      %v695 = vmax.f32 %v675, 0.0
      %v696 = vmax.f32 %v677, 0.0
      %v697 = vmax.f32 %v679, 0.0
      %v698 = vmax.f32 %v681, 0.0
      %v699 = vld [vmem:[%s3] sm:$0xf]
      %v700 = vld [vmem:[%s3 + $0x4] sm:$0xf]
      %v701 = vld [vmem:[%s3 + $0x8] sm:$0x7]
      %v702 = vpack.c.bf16 %v685, %v683
      %v703 = vpack.c.bf16 %v686, %v684
      %v704 = vpack.c.bf16 %v689, %v687
      %v705 = vpack.c.bf16 %v690, %v688
      %v706 = vpack.c.bf16 %v693, %v691
      %v707 = vpack.c.bf16 %v694, %v692
      %v708 = vpack.c.bf16 %v697, %v695
      %v709 = vpack.c.bf16 %v698, %v696
      %v710 = vld [vmem:[%s4] sm:$0xff]
      %v711 = vld [vmem:[%s4 + $0x8] sm:$0xff]
      %v712 = vld [vmem:[%s4 + $0x10] sm:$0x1f]
      %714 = vset.pattern.permute.xlu0 0
      %715 = vperm.xlu0 %714, %v710
      %v716 = vpop.permute.xlu0 %715
      %719 = vset.pattern.permute.xlu0 0
      %720 = vperm.xlu0 %719, %v711
      %v721 = vpop.permute.xlu0 %720
      %724 = vset.pattern.permute.xlu0 0
      %725 = vperm.xlu0 %724, %v712
      %v726 = vpop.permute.xlu0 %725
      %v731 = vunpack.c.l.b16 %v699
      %v732 = vunpack.c.l.b16 %v700
      %v733 = vunpack.c.l.b16 %v701
      %v734 = vpack.c.b16 %v732, %v731
      %v735 = vpack.c.b16 %v733, %v733
      %vm736 = vcmask 523264
      %v738 = vsel %vm736, %v734, 0
      %v741 = vsel %vm736, %v735, 0
      %743 = vmatprep.subr.bf16.mxu0 0
      %744 = vmatpush1.bf16.msra.mxu0 0
      %745 = vmatprep.subr.bf16.mxu0 0
      %746 = vmatpush1.bf16.msra.mxu0 0
      %747 = vmatprep.subr.bf16.mxu0 0
      %748 = vmatpush1.bf16.msra.mxu0 0
      %749 = vmatprep.subr.bf16.mxu0 0
      %750 = vmatpush1.bf16.msra.mxu0 0
      %751 = vmatprep.subr.bf16.mxu0 %v709
      %752 = vmatpush1.bf16.msra.mxu0 %v708
      %753 = vmatprep.subr.bf16.mxu0 %v707
      %754 = vmatpush1.bf16.msra.mxu0 %v706
      %755 = vmatprep.subr.bf16.mxu0 %v705
      %756 = vmatpush1.bf16.msra.mxu0 %v704
      %757 = vmatprep.subr.bf16.mxu0 %v703
      %758 = vmatpush1.bf16.msra.mxu0 %v702
      %759 = vmatprep.subr.bf16.mxu0 0
      %760 = vmatpush2.bf16.msra.mxu0 0
      %761 = vmatprep.subr.bf16.mxu0 0
      %762 = vmatpush2.bf16.msra.mxu0 0
      %763 = vmatprep.subr.bf16.mxu0 0
      %764 = vmatpush2.bf16.msra.mxu0 0
      %765 = vmatprep.subr.bf16.mxu0 0
      %766 = vmatpush2.bf16.msra.mxu0 0
      %767 = vmatprep.subr.bf16.mxu0 0
      %768 = vmatpush2.bf16.msra.mxu0 0
      %769 = vmatprep.subr.bf16.mxu0 0
      %770 = vmatpush2.bf16.msra.mxu0 0
      %771 = vmatprep.subr.bf16.mxu0 0
      %772 = vmatpush2.bf16.msra.mxu0 0
      %773 = vmatprep.subr.bf16.mxu0 0
      %774 = vmatpush2.bf16.msra.mxu0 0
      %775 = vmatprep.mubr.bf16.mxu0 0
      %776 = vmatmul.mubr.bf16.gmra.mxu0 %v738
      %v777 = vpop.f32.mrf.mxu0
      %v778 = vadd.f32 %v716, %v777
      %v779 = vpop.f32.mrf.mxu0
      %v780 = vadd.f32 %v716, %v779
      %v781 = vpop.f32.mrf.mxu0
      %v782 = vadd.f32 %v721, %v781
      %v783 = vpop.f32.mrf.mxu0
      %v784 = vadd.f32 %v721, %v783
      %785 = vmatprep.mubr.bf16.mxu0 0
      %786 = vmatmul.mubr.bf16.gmra.mxu0 %v741
      %v787 = vpop.f32.mrf.mxu0
      %v788 = vadd.f32 %v726, %v787
      %v789 = vpop.f32.mrf.mxu0
      %v790 = vadd.f32 %v726, %v789
      %v791 = vpop.f32.mrf.mxu0
      %v792 = vpop.f32.mrf.mxu0
      %793 = vdwg.mxu0
      %v794 = vlaneseq
      %v795 = vshrl.u32 %v794, 7
      %v796 = vrot.slane %v778, 4
      %v797 = vmax.f32 %v778, %v796
      %v798 = vrot.slane %v797, 2
      %v799 = vmax.f32 %v797, %v798
      %v800 = vrot.slane %v799, 1
      %v801 = vmax.f32 %v799, %v800
      %v802 = vrot.slane %v780, 4
      %v803 = vmax.f32 %v780, %v802
      %v804 = vrot.slane %v803, 2
      %v805 = vmax.f32 %v803, %v804
      %v806 = vrot.slane %v805, 1
      %v807 = vmax.f32 %v805, %v806
      %vm808 = vcmp.eq.f32.partialorder %v778, %v801
      %vm809 = vcmp.eq.f32.partialorder %v780, %v807
      %v810 = vsel %vm808, %v795, 8
      %v811 = vsel %vm809, %v795, 8
      %v812 = vrot.slane %v810, 4
      %vm813 = vcmp.lt.s32.totalorder %v810, %v812
      %v814 = vsel %vm813, %v810, %v812
      %v815 = vrot.slane %v814, 2
      %vm816 = vcmp.lt.s32.totalorder %v814, %v815
      %v817 = vsel %vm816, %v814, %v815
      %v818 = vrot.slane %v817, 1
      %vm819 = vcmp.lt.s32.totalorder %v817, %v818
      %v820 = vsel %vm819, %v817, %v818
      %v821 = vrot.slane %v811, 4
      %vm822 = vcmp.lt.s32.totalorder %v811, %v821
      %v823 = vsel %vm822, %v811, %v821
      %v824 = vrot.slane %v823, 2
      %vm825 = vcmp.lt.s32.totalorder %v823, %v824
      %v826 = vsel %vm825, %v823, %v824
      %v827 = vrot.slane %v826, 1
      %vm828 = vcmp.lt.s32.totalorder %v826, %v827
      %v829 = vsel %vm828, %v826, %v827
      %v830 = vrot.slane %v782, 4
      %v831 = vmax.f32 %v782, %v830
      %v832 = vrot.slane %v831, 2
      %v833 = vmax.f32 %v831, %v832
      %v834 = vrot.slane %v833, 1
      %v835 = vmax.f32 %v833, %v834
      %v836 = vrot.slane %v784, 4
      %v837 = vmax.f32 %v784, %v836
      %v838 = vrot.slane %v837, 2
      %v839 = vmax.f32 %v837, %v838
      %v840 = vrot.slane %v839, 1
      %v841 = vmax.f32 %v839, %v840
      %vm842 = vcmp.eq.f32.partialorder %v782, %v835
      %vm843 = vcmp.eq.f32.partialorder %v784, %v841
      %v844 = vsel %vm842, %v795, 8
      %v845 = vsel %vm843, %v795, 8
      %v846 = vrot.slane %v844, 4
      %vm847 = vcmp.lt.s32.totalorder %v844, %v846
      %v848 = vsel %vm847, %v844, %v846
      %v849 = vrot.slane %v848, 2
      %vm850 = vcmp.lt.s32.totalorder %v848, %v849
      %v851 = vsel %vm850, %v848, %v849
      %v852 = vrot.slane %v851, 1
      %vm853 = vcmp.lt.s32.totalorder %v851, %v852
      %v854 = vsel %vm853, %v851, %v852
      %v855 = vrot.slane %v845, 4
      %vm856 = vcmp.lt.s32.totalorder %v845, %v855
      %v857 = vsel %vm856, %v845, %v855
      %v858 = vrot.slane %v857, 2
      %vm859 = vcmp.lt.s32.totalorder %v857, %v858
      %v860 = vsel %vm859, %v857, %v858
      %v861 = vrot.slane %v860, 1
      %vm862 = vcmp.lt.s32.totalorder %v860, %v861
      %v863 = vsel %vm862, %v860, %v861
      %v864 = vcombine.low %v820, %v829
      %v866 = vunpack.c.l.s4 1966171168
      %v867 = vunpack.c.0.s8 %v866
      %v868 = vlaneseq
      %v869 = vshrl.u32 %v868, 7
      %v870 = vsub.s32 %v867, %v869
      %v871 = vrot.slane %v864, %v870
      %v873 = vunpack.c.l.s4 1966171168
      %v874 = vunpack.c.0.s8 %v873
      %v875 = vlaneseq
      %v876 = vshrl.u32 %v875, 7
      %v877 = vsub.s32 %v874, %v876
      %v878 = vrot.slane %v871, %v877
      %v879 = vlaneseq
      %vm880 = vcmp.ge.s32.totalorder %v879, 0
      %vm881 = vcmp.lt.s32.totalorder %v879, 256
      %vm882 = vmand %vm880, %vm881
      %883 = vst.msk [vmem:[%s458] sm:$0x3] %vm882, %v878
      %v884 = vmul.u32 %v820, 1000
      %v885 = vmul.u32 %v829, 1000
      %v886 = vcombine.low %v884, %v885
      %v888 = vunpack.c.l.s4 1966171168
      %v889 = vunpack.c.0.s8 %v888
      %v890 = vlaneseq
      %v891 = vshrl.u32 %v890, 7
      %v892 = vsub.s32 %v889, %v891
      %v893 = vrot.slane %v886, %v892
      %v895 = vunpack.c.l.s4 1966171168
      %v896 = vunpack.c.0.s8 %v895
      %v897 = vlaneseq
      %v898 = vshrl.u32 %v897, 7
      %v899 = vsub.s32 %v896, %v898
      %v900 = vrot.slane %v893, %v899
      %901 = vst.msk [vmem:[%s467] sm:$0x3] %vm882, %v900
      %v902 = vmul.u32 %v854, 1000
      %v903 = vmul.u32 %v863, 1000
      %v904 = vcombine.low %v902, %v903
      %v906 = vunpack.c.l.s4 1966171168
      %v907 = vunpack.c.0.s8 %v906
      %v908 = vlaneseq
      %v909 = vshrl.u32 %v908, 7
      %v910 = vsub.s32 %v907, %v909
      %v911 = vrot.slane %v904, %v910
      %v913 = vunpack.c.l.s4 1966171168
      %v914 = vunpack.c.0.s8 %v913
      %v915 = vlaneseq
      %v916 = vshrl.u32 %v915, 7
      %v917 = vsub.s32 %v914, %v916
      %v918 = vrot.slane %v911, %v917
      %919 = vst.msk [vmem:[%s476] sm:$0x3] %vm882, %v918
      %v922 = vcombine.low %v788, %v790
      %v924 = vunpack.c.l.s4 1966171168
      %v925 = vunpack.c.0.s8 %v924
      %v926 = vlaneseq
      %v927 = vshrl.u32 %v926, 7
      %v928 = vsub.s32 %v925, %v927
      %v929 = vrot.slane %v922, %v928
      %v931 = vunpack.c.l.s4 1966171168
      %v932 = vunpack.c.0.s8 %v931
      %v933 = vlaneseq
      %v934 = vshrl.u32 %v933, 7
      %v935 = vsub.s32 %v932, %v934
      %v936 = vrot.slane %v929, %v935
      %938 = vst.msk [vmem:[%s485] sm:$0x3] %vm882, %v936
      %v940 = vunpack.c.l.s4 1983009808
      %v941 = vunpack.c.0.s8 %v940
      %v942 = vlaneseq
      %v943 = vshrl.u32 %v942, 7
      %v944 = vsub.s32 %v941, %v943
      %v945 = vrot.slane %v922, %v944
      %v946 = vcombine.high %v945, %v945
      %vm947 = vcmask 1040384
      %vm948 = vcmask 1042434
      %vm949 = vmor %vm947, %vm948
      %vm950 = vcmask 1044484
      %vm951 = vmor %vm949, %vm950
      %vm952 = vcmask 1046534
      %vm953 = vmor %vm951, %vm952
      %v954 = vrot.slane %v945, 7
      %v955 = vrot.slane %v954, 2
      %v956 = vrot.slane %v946, 7
      %v957 = vsel %vm953, %v955, %v956
      %959 = vst [vmem:[%s495] sm:$0xf] %v957
      %v960 = vcombine.high %v788, %v790
      %v962 = vunpack.c.l.s4 1983009808
      %v963 = vunpack.c.0.s8 %v962
      %v964 = vlaneseq
      %v965 = vshrl.u32 %v964, 7
      %v966 = vsub.s32 %v963, %v965
      %v967 = vrot.slane %v960, %v966
      %v968 = vrot.slane %v956, 2
      %v969 = vrot.slane %v967, 7
      %v970 = vsel %vm953, %v968, %v969
      %972 = vst [vmem:[%s505] sm:$0xf] %v970
      %s973 = smul.u32 2, %s27
      %p974 = scmp.lt.s32.totalorder %s26, 1
      %s975 = scalar_select %p974, %s26, 1
      %p976 = scmp.lt.s32.totalorder %s973, 1
      %s977 = scalar_select %p976, %s973, 1
      %s978 = smul.addr %s975, 2
      %s979 = sadd.s32 %s977, %s978
      %s980 = scalar_lea.vmem %s5, %s979
      %s981 = smul.u32 2, %s27
      %p982 = scmp.lt.s32.totalorder %s26, 1
      %s983 = scalar_select %p982, %s26, 1
      %p984 = scmp.lt.s32.totalorder %s981, 1
      %s985 = scalar_select %p984, %s981, 1
      %s986 = smul.addr %s983, 2
      %s987 = sadd.s32 %s985, %s986
      %s988 = scalar_lea.vmem %s6, %s987
      %s989 = smul.u32 2, %s27
      %p990 = scmp.lt.s32.totalorder %s26, 1
      %s991 = scalar_select %p990, %s26, 1
      %p992 = scmp.lt.s32.totalorder %s989, 1
      %s993 = scalar_select %p992, %s989, 1
      %s994 = smul.addr %s991, 2
      %s995 = sadd.s32 %s993, %s994
      %s996 = scalar_lea.vmem %s7, %s995
      %s997 = smul.u32 2, %s27
      %p998 = scmp.lt.s32.totalorder %s26, 1
      %s999 = scalar_select %p998, %s26, 1
      %p1000 = scmp.lt.s32.totalorder %s997, 1
      %s1001 = scalar_select %p1000, %s997, 1
      %s1002 = smul.addr %s999, 2
      %s1003 = sadd.s32 %s1001, %s1002
      %s1004 = scalar_lea.vmem %s8, %s1003
      %s1005 = smul.u32 2, %s27
      %p1006 = scmp.lt.s32.totalorder %s26, 1
      %s1007 = scalar_select %p1006, %s26, 1
      %p1008 = scmp.lt.s32.totalorder %s1005, 1
      %s1009 = scalar_select %p1008, %s1005, 1
      %s1010 = smul.addr %s1007, 2
      %s1011 = sadd.s32 %s1009, %s1010
      %s1012 = smul.addr %s1011, 2
      %s1013 = scalar_lea.vmem %s9, %s1012
      %s1014 = smul.u32 2, %s27
      %p1015 = scmp.lt.s32.totalorder %s26, 1
      %s1016 = scalar_select %p1015, %s26, 1
      %p1017 = scmp.lt.s32.totalorder %s1014, 1
      %s1018 = scalar_select %p1017, %s1014, 1
      %s1019 = smul.addr %s1016, 2
      %s1020 = sadd.s32 %s1018, %s1019
      %s1021 = smul.addr %s1020, 2
      %s1022 = scalar_lea.vmem %s10, %s1021
      // Predicated region
      $region41: #{panoptic_forward.1} parent=39 // pred_check
        %p1023 = pneg %p166
      $region42: #{panoptic_forward.1} parent=39 // pred_check_branch
        %1025 = sbr.rel (%p1023) target = $region44
      $region43: #{panoptic_forward.1} parent=39 // pred_region
        %s1026 = smul.u32 2, %s27
      $region44: #{panoptic_forward.1} parent=39 // pred_fallthru
        _
      // Predicated region
      $region45: #{panoptic_forward.1} parent=39 // pred_check
        %p1027 = pneg %p194
      $region46: #{panoptic_forward.1} parent=39 // pred_check_branch
        %1029 = sbr.rel (%p1027) target = $region48
      $region47: #{panoptic_forward.1} parent=39 // pred_region
        %s1030 = smul.u32 2, %s27
      $region48: #{panoptic_forward.1} parent=39 // pred_fallthru
        _
      // Predicated region
      $region49: #{panoptic_forward.1} parent=39 // pred_check
        %p1031 = pneg %p222
      $region50: #{panoptic_forward.1} parent=39 // pred_check_branch
        %1033 = sbr.rel (%p1031) target = $region52
      $region51: #{panoptic_forward.1} parent=39 // pred_region
        %s1034 = smul.u32 2, %s27
      $region52: #{panoptic_forward.1} parent=39 // pred_fallthru
        _
      // Predicated region
      $region53: #{panoptic_forward.1} parent=39 // pred_check
        %p1035 = pneg %p250
      $region54: #{panoptic_forward.1} parent=39 // pred_check_branch
        %1037 = sbr.rel (%p1035) target = $region56
      $region55: #{panoptic_forward.1} parent=39 // pred_region
        %s1038 = smul.u32 2, %s27
      $region56: #{panoptic_forward.1} parent=39 // pred_fallthru
        _
      // Predicated region
      $region57: #{panoptic_forward.1} parent=39 // pred_check
        %p1039 = pneg %p278
      $region58: #{panoptic_forward.1} parent=39 // pred_check_branch
        %1041 = sbr.rel (%p1039) target = $region60
      $region59: #{panoptic_forward.1} parent=39 // pred_region
        %s1042 = smul.u32 2, %s27
      $region60: #{panoptic_forward.1} parent=39 // pred_fallthru
        _
      // Predicated region
      $region61: #{panoptic_forward.1} parent=39 // pred_check
        %p1043 = pneg %p306
      $region62: #{panoptic_forward.1} parent=39 // pred_check_branch
        %1045 = sbr.rel (%p1043) target = $region64
      $region63: #{panoptic_forward.1} parent=39 // pred_region
        %s1046 = smul.u32 2, %s27
      $region64: #{panoptic_forward.1} parent=39 // pred_fallthru
        _
    $region40: #{panoptic_forward.1} parent=5 // pred_fallthru
      _
    %p1047 = scmp.le.s32.totalorder 2, %s17
    // Predicated region
    $region65: #{panoptic_forward.1} parent=5 // pred_check
      %p1048 = pneg %p1047
    $region66: #{panoptic_forward.1} parent=5 // pred_check_branch
      %1050 = sbr.rel (%p1048) target = $region68
    $region67: #{panoptic_forward.1} parent=5 // pred_region
      %s1051 = ssub.s32 %s17, 2
      // Predicated region
      $region69: #{panoptic_forward.1} parent=67 // pred_check
        %p1052 = pneg %p172
      $region70: #{panoptic_forward.1} parent=67 // pred_check_branch
        %1054 = sbr.rel (%p1052) target = $region72
      $region71: #{panoptic_forward.1} parent=67 // pred_region
        %s1055 = smul.u32 2, %s29
        %p1056 = scmp.lt.s32.totalorder %s28, 1
        %s1057 = scalar_select %p1056, %s28, 1
        %p1058 = scmp.lt.s32.totalorder %s1055, 1
        %s1059 = scalar_select %p1058, %s1055, 1
        %s1060 = smul.addr %s1057, 2
        %s1061 = sadd.s32 %s1059, %s1060
        %s1062 = scalar_lea.vmem %s5, %s1061
      $region72: #{panoptic_forward.1} parent=67 // pred_fallthru
        _
      // Predicated region
      $region73: #{panoptic_forward.1} parent=67 // pred_check
        %p1063 = pneg %p200
      $region74: #{panoptic_forward.1} parent=67 // pred_check_branch
        %1065 = sbr.rel (%p1063) target = $region76
      $region75: #{panoptic_forward.1} parent=67 // pred_region
        %s1066 = smul.u32 2, %s29
        %p1067 = scmp.lt.s32.totalorder %s28, 1
        %s1068 = scalar_select %p1067, %s28, 1
        %p1069 = scmp.lt.s32.totalorder %s1066, 1
        %s1070 = scalar_select %p1069, %s1066, 1
        %s1071 = smul.addr %s1068, 2
        %s1072 = sadd.s32 %s1070, %s1071
        %s1073 = scalar_lea.vmem %s6, %s1072
      $region76: #{panoptic_forward.1} parent=67 // pred_fallthru
        _
      // Predicated region
      $region77: #{panoptic_forward.1} parent=67 // pred_check
        %p1074 = pneg %p228
      $region78: #{panoptic_forward.1} parent=67 // pred_check_branch
        %1076 = sbr.rel (%p1074) target = $region80
      $region79: #{panoptic_forward.1} parent=67 // pred_region
        %s1077 = smul.u32 2, %s29
        %p1078 = scmp.lt.s32.totalorder %s28, 1
        %s1079 = scalar_select %p1078, %s28, 1
        %p1080 = scmp.lt.s32.totalorder %s1077, 1
        %s1081 = scalar_select %p1080, %s1077, 1
        %s1082 = smul.addr %s1079, 2
        %s1083 = sadd.s32 %s1081, %s1082
        %s1084 = scalar_lea.vmem %s7, %s1083
      $region80: #{panoptic_forward.1} parent=67 // pred_fallthru
        _
      // Predicated region
      $region81: #{panoptic_forward.1} parent=67 // pred_check
        %p1085 = pneg %p256
      $region82: #{panoptic_forward.1} parent=67 // pred_check_branch
        %1087 = sbr.rel (%p1085) target = $region84
      $region83: #{panoptic_forward.1} parent=67 // pred_region
        %s1088 = smul.u32 2, %s29
        %p1089 = scmp.lt.s32.totalorder %s28, 1
        %s1090 = scalar_select %p1089, %s28, 1
        %p1091 = scmp.lt.s32.totalorder %s1088, 1
        %s1092 = scalar_select %p1091, %s1088, 1
        %s1093 = smul.addr %s1090, 2
        %s1094 = sadd.s32 %s1092, %s1093
        %s1095 = scalar_lea.vmem %s8, %s1094
      $region84: #{panoptic_forward.1} parent=67 // pred_fallthru
        _
      // Predicated region
      $region85: #{panoptic_forward.1} parent=67 // pred_check
        %p1096 = pneg %p284
      $region86: #{panoptic_forward.1} parent=67 // pred_check_branch
        %1098 = sbr.rel (%p1096) target = $region88
      $region87: #{panoptic_forward.1} parent=67 // pred_region
        %s1099 = smul.u32 2, %s29
        %p1100 = scmp.lt.s32.totalorder %s28, 1
        %s1101 = scalar_select %p1100, %s28, 1
        %p1102 = scmp.lt.s32.totalorder %s1099, 1
        %s1103 = scalar_select %p1102, %s1099, 1
        %s1104 = smul.addr %s1101, 2
        %s1105 = sadd.s32 %s1103, %s1104
        %s1106 = smul.addr %s1105, 2
        %s1107 = scalar_lea.vmem %s9, %s1106
      $region88: #{panoptic_forward.1} parent=67 // pred_fallthru
        _
      // Predicated region
      $region89: #{panoptic_forward.1} parent=67 // pred_check
        %p1108 = pneg %p312
      $region90: #{panoptic_forward.1} parent=67 // pred_check_branch
        %1110 = sbr.rel (%p1108) target = $region92
      $region91: #{panoptic_forward.1} parent=67 // pred_region
        %s1111 = smul.u32 2, %s29
        %p1112 = scmp.lt.s32.totalorder %s28, 1
        %s1113 = scalar_select %p1112, %s28, 1
        %p1114 = scmp.lt.s32.totalorder %s1111, 1
        %s1115 = scalar_select %p1114, %s1111, 1
        %s1116 = smul.addr %s1113, 2
        %s1117 = sadd.s32 %s1115, %s1116
        %s1118 = smul.addr %s1117, 2
        %s1119 = scalar_lea.vmem %s10, %s1118
      $region92: #{panoptic_forward.1} parent=67 // pred_fallthru
        _
    $region68: #{panoptic_forward.1} parent=5 // pred_fallthru
      _
  $region6: #{panoptic_forward.1} parent=0 // loop_footer
    %s21 = sadd.s32 1, %s17
  $region7: #{panoptic_forward.1} parent=0 // loop_footer_branch
    %16 = sbr.rel target = $region3
  $region8: #{panoptic_forward.1} parent=0 // loop_exit
    _

</llo_original>
